<compile_context>
chip_gen: v7x
topology: tpu7x:2x2x1
jax: 0.10.0
libtpu: 0.0.40
codegen_flags: <defaults>
</compile_context>

<pallas_src>
import functools

import jax
import jax.numpy as jnp
from jax.experimental import pallas as pl
from jax.experimental.pallas import tpu as pltpu


def _round_up(x, m):
    return ((x + m - 1) // m) * m


def _log_p_kernel(y_ref, delta_ref, out_ref, *, d_total, td, need_mask):
    """Accumulate one (tb, td) tile of  sum_d y[b, d] * delta[d]  into out_ref."""
    d = pl.program_id(1)

    @pl.when(d == 0)
    def _():
        out_ref[...] = jnp.zeros_like(out_ref)

    y = y_ref[...].astype(jnp.float32)          # widen AFTER the load (no-op for f32)
    prod = y * delta_ref[...]                    # delta stays f32 (accuracy)

    if need_mask:
        # Last D tile is ragged: out-of-range lanes hold unspecified data -> zero them.
        col = jax.lax.broadcasted_iota(jnp.int32, prod.shape, 1) + d * td
        prod = jnp.where(col < d_total, prod, 0.0)

    out_ref[...] += jnp.sum(prod, axis=-1, keepdims=True)


def approx_wmc_forward(y, logits, *, target_tile_bytes=3 * 1024 * 1024, max_td=2048):
    """forward(y) -> log_prob, shape (batch,). y: (batch, dim) with entries in {0,1}."""
    B, D = y.shape

    # Accept f32 or bf16 y directly — no extra wrapper-side cast pass over the
    # dominant HBM stream. (bf16 is exact for {0,1} inputs.)
    if y.dtype not in (jnp.float32, jnp.bfloat16):
        y = y.astype(jnp.float32)
    itemsize = y.dtype.itemsize
    row_align = 16 if y.dtype == jnp.bfloat16 else 8    # sublane packing constraint

    logits = logits.astype(jnp.float32)
    delta = logits.reshape(1, D)                         # log_sig(x) - log_sig(-x) == x
    const = jnp.sum(jax.nn.log_sigmoid(-logits))         # O(D) glue, added outside

    # ---- D tiling: keeps tb large and VMEM bounded for big D -------------------
    if D <= max_td:
        td, nd = D, 1          # full-extent lane dim: no 128-divisibility required
    else:
        td = max(128, (max_td // 128) * 128)             # non-full blocks: lane-aligned
        nd = pl.cdiv(D, td)
    need_mask = (nd > 1) and (D % td != 0)

    # ---- batch tiling: size by bytes (~2-4 MiB of y per tile) ------------------
    # Double-buffered y (2 * tb * td * itemsize) plus delta/output blocks stays
    # well under the default scoped VMEM limit on v5e (16 MiB), v6e (32 MiB) and
    # v7x (32 MiB scoped / 64 MiB physical), so no vmem_limit_bytes override needed.
    tb = int(target_tile_bytes // (td * itemsize))
    tb = max(row_align, (tb // row_align) * row_align)
    tb = min(tb, _round_up(B, row_align))                # don't over-pad tiny batches
    nb = pl.cdiv(B, tb)

    kernel = functools.partial(_log_p_kernel, d_total=D, td=td, need_mask=need_mask)

    out = pl.pallas_call(
        kernel,
        out_shape=jax.ShapeDtypeStruct((B, 1), jnp.float32),
        grid_spec=pltpu.PrefetchScalarGridSpec(
            num_scalar_prefetch=0,
            grid=(nb, nd),                                       # reduction axis last
            in_specs=[
                pl.BlockSpec((tb, td), lambda i, d: (i, d)),     # y tile, native dtype
                pl.BlockSpec((1, td), lambda i, d: (0, d)),      # delta (f32), tiny
            ],
            out_specs=pl.BlockSpec((tb, 1), lambda i, d: (i, 0)),  # resident over D
        ),
        compiler_params=pltpu.CompilerParams(
            # TODO(synk): on v7x, confirm both TensorCores stream the batch axis;
            # if not, switch the first axis to pltpu.CORE_PARALLEL / pl.core_map.
            dimension_semantics=("parallel", "arbitrary"),
        ),
    )(y, delta)

    return out[:, 0] + const


def approx_wmc_reference(y, logits):
    lp1 = jax.nn.log_sigmoid(logits)[None, :]
    lp0 = jax.nn.log_sigmoid(-logits)[None, :]
    return jnp.sum(y * lp1 + (1.0 - y) * lp0, axis=-1)


if __name__ == "__main__":
    key = jax.random.PRNGKey(0)
    k_y, k_w, k_y2, k_w2 = jax.random.split(key, 4)

    # Case 1: f32 y, ragged batch, single full-extent D block (no pad anywhere).
    batch, dim = 300, 200
    y = jax.random.bernoulli(k_y, p=0.5, shape=(batch, dim)).astype(jnp.float32)
    logits = (0.1 * jax.random.normal(k_w, (dim,))).astype(jnp.float32)
    ref = approx_wmc_reference(y, logits)
    log_prob = jax.block_until_ready(approx_wmc_forward(y, logits))
    assert log_prob.shape == (batch,)
    assert jnp.allclose(log_prob, ref, atol=1e-3, rtol=1e-4), (log_prob, ref)

    # Case 2: bf16 y (exact for {0,1}), tiny tile target to force multiple batch
    # tiles AND multiple D tiles, ragged on both axes (exercises the mask path).
    batch2, dim2 = 83, 300
    y2 = jax.random.bernoulli(k_y2, p=0.5, shape=(batch2, dim2)).astype(jnp.bfloat16)
    logits2 = (0.3 * jax.random.normal(k_w2, (dim2,))).astype(jnp.float32)
    ref2 = approx_wmc_reference(y2.astype(jnp.float32), logits2)
    log_prob2 = jax.block_until_ready(
        approx_wmc_forward(y2, logits2, target_tile_bytes=16 * 1024, max_td=128))
    assert log_prob2.shape == (batch2,)
    assert jnp.allclose(log_prob2, ref2, atol=1e-3, rtol=1e-4), (log_prob2, ref2)

    print("KERNEL_OK")
</pallas_src>

<mosaic_0001>
module attributes {stable_mosaic.version = 11 : i64} {
  func.func @_log_p_kernel(%arg0: i32, %arg1: i32, %arg2: memref<304x200xf32, #tpu.memory_space<vmem>>, %arg3: memref<1x200xf32, #tpu.memory_space<vmem>>, %arg4: memref<304x1xf32, #tpu.memory_space<vmem>>) attributes {dimension_semantics = [#tpu.dimension_semantics<parallel>, #tpu.dimension_semantics<arbitrary>], iteration_bounds = array<i64: 1, 1>, scalar_prefetch = 0 : i64, scratch_operands = 0 : i64, tpu.core_type = #tpu.core_type<tc>, window_params = [{transform_indices = @transform_0, window_bounds = array<i64: 304, 200>}, {transform_indices = @transform_1, window_bounds = array<i64: 1, 200>}, {transform_indices = @transform_2, window_bounds = array<i64: 304, 1>}]} {
    %c0_i32 = arith.constant 0 : i32
    %0 = arith.cmpi eq, %arg1, %c0_i32 : i32
    %1 = arith.extui %0 : i1 to i32
    %c0_i32_0 = arith.constant 0 : i32
    %2 = arith.cmpi ne, %1, %c0_i32_0 : i32
    scf.if %2 {
      %cst_8 = arith.constant 0.000000e+00 : f32
      %12 = vector.broadcast %cst_8 : f32 to vector<304x1xf32>
      %c0_9 = arith.constant 0 : index
      %c0_10 = arith.constant 0 : index
      %13 = vector.load %arg4[%c0_9, %c0_10] : memref<304x1xf32, #tpu.memory_space<vmem>>, vector<304x1xf32>
      tpu.vector_store %arg4[%c0_9, %c0_10], %12 {strides = array<i32>} : memref<304x1xf32, #tpu.memory_space<vmem>>, vector<304x1xf32>,
    } else {
    }
    %c0 = arith.constant 0 : index
    %c0_1 = arith.constant 0 : index
    %3 = vector.load %arg2[%c0, %c0_1] : memref<304x200xf32, #tpu.memory_space<vmem>>, vector<304x200xf32>
    %c0_2 = arith.constant 0 : index
    %c0_3 = arith.constant 0 : index
    %4 = vector.load %arg3[%c0_2, %c0_3] : memref<1x200xf32, #tpu.memory_space<vmem>>, vector<1x200xf32>
    %5 = vector.broadcast %4 : vector<1x200xf32> to vector<304x200xf32>
    %6 = arith.mulf %3, %5 : vector<304x200xf32>
    %c0_4 = arith.constant 0 : index
    %c0_5 = arith.constant 0 : index
    %7 = vector.load %arg4[%c0_4, %c0_5] : memref<304x1xf32, #tpu.memory_space<vmem>>, vector<304x1xf32>
    %cst = arith.constant dense<0.000000e+00> : vector<304xf32>
    %8 = vector.multi_reduction <add>, %6, %cst [1] : vector<304x200xf32> to vector<304xf32>
    %9 = vector.shape_cast %8 : vector<304xf32> to vector<304x1xf32>
    %10 = arith.addf %7, %9 : vector<304x1xf32>
    %c0_6 = arith.constant 0 : index
    %c0_7 = arith.constant 0 : index
    %11 = vector.load %arg4[%c0_6, %c0_7] : memref<304x1xf32, #tpu.memory_space<vmem>>, vector<304x1xf32>
    tpu.vector_store %arg4[%c0_6, %c0_7], %10 {strides = array<i32>} : memref<304x1xf32, #tpu.memory_space<vmem>>, vector<304x1xf32>,
    return
  }
  func.func @transform_0(%arg0: i32, %arg1: i32) -> (i32, i32) {
    %c0_i32 = arith.constant 0 : i32
    return %arg0, %arg1 : i32, i32
  }
  func.func @transform_1(%arg0: i32, %arg1: i32) -> (i32, i32) {
    %c0_i32 = arith.constant 0 : i32
    %c0_i32_0 = arith.constant 0 : i32
    return %c0_i32, %arg1 : i32, i32
  }
  func.func @transform_2(%arg0: i32, %arg1: i32) -> (i32, i32) {
    %c0_i32 = arith.constant 0 : i32
    %c0_i32_0 = arith.constant 0 : i32
    return %arg0, %c0_i32 : i32, i32
  }
}

</mosaic_0001>

<llo_original>
// kernel: tpu_custom_call.1
$region0: #{tpu_custom_call.1}
  #allocation0 [shape = 'u32[]', space=smem, size = 0x4, offset = 0x4, fixed_abs, tag = 'smem constant byte address 0x4 - core index']
  #allocation1 [shape = 'u32[144,128]{1,0:T(1,128)}', space=vmem, size = 0x12000, scoped, tag = 'internal scratch']
  %s0 = inlined_call_operand.vmem [shape: f32[300,200], index: 0, kind: input, shape index: {}]
  %s1 = inlined_call_operand.vmem [shape: f32[1,200], index: 1, kind: input, shape index: {}]
  %s2 = inlined_call_operand.vmem [shape: f32[300,1], index: 2, kind: output, shape index: {}]
  %s3 = sld [smem:[#allocation0]]
  $region22: #{tpu_custom_call.1} parent=0
    _
  %s5 = ssub.s32 1, %s3
  %s6 = scalar_select 0, %s5, %s3
  // Predicated region
  $region2: #{tpu_custom_call.1} parent=0 // pred_check
    _
  $region3: #{tpu_custom_call.1} parent=0 // pred_check_branch
    %8 = sbr.rel (0) target = $region5
  $region4: #{tpu_custom_call.1} parent=0 // pred_region
    _
  $region5: #{tpu_custom_call.1} parent=0 // pred_fallthru
    _
  // Predicated region
  $region6: #{tpu_custom_call.1} parent=0 // pred_check
    _
  $region7: #{tpu_custom_call.1} parent=0 // pred_check_branch
    %10 = sbr.rel (0) target = $region9
  $region8: #{tpu_custom_call.1} parent=0 // pred_region
    _
  $region9: #{tpu_custom_call.1} parent=0 // pred_fallthru
    _
  %p11 = scmp.eq.s32.totalorder 0, 0
  // Predicated region
  $region10: #{tpu_custom_call.1} parent=0 // pred_check
    %p12 = pneg %p11
  $region11: #{tpu_custom_call.1} parent=0 // pred_check_branch
    %14 = sbr.rel (%p12) target = $region13
  $region12: #{tpu_custom_call.1} parent=0 // pred_region
    %vm15 = vcmask 7168
    %16 = vst.msk [vmem:[%s2] sm:$0xff] %vm15, 0.0
    %17 = vst.msk [vmem:[%s2 + $0x8] sm:$0xff] %vm15, 0.0
    %18 = vst.msk [vmem:[%s2 + $0x10] sm:$0xff] %vm15, 0.0
    %19 = vst.msk [vmem:[%s2 + $0x18] sm:$0xff] %vm15, 0.0
    %20 = vst.msk [vmem:[%s2 + $0x20] sm:$0xff] %vm15, 0.0
    %21 = vst.msk [vmem:[%s2 + $0x28] sm:$0xff] %vm15, 0.0
    %22 = vst.msk [vmem:[%s2 + $0x30] sm:$0xff] %vm15, 0.0
    %23 = vst.msk [vmem:[%s2 + $0x38] sm:$0xff] %vm15, 0.0
    %24 = vst.msk [vmem:[%s2 + $0x40] sm:$0xff] %vm15, 0.0
    %25 = vst.msk [vmem:[%s2 + $0x48] sm:$0xff] %vm15, 0.0
    %26 = vst.msk [vmem:[%s2 + $0x50] sm:$0xff] %vm15, 0.0
    %27 = vst.msk [vmem:[%s2 + $0x58] sm:$0xff] %vm15, 0.0
    %28 = vst.msk [vmem:[%s2 + $0x60] sm:$0xff] %vm15, 0.0
    %29 = vst.msk [vmem:[%s2 + $0x68] sm:$0xff] %vm15, 0.0
    %30 = vst.msk [vmem:[%s2 + $0x70] sm:$0xff] %vm15, 0.0
    %31 = vst.msk [vmem:[%s2 + $0x78] sm:$0xff] %vm15, 0.0
    %32 = vst.msk [vmem:[%s2 + $0x80] sm:$0xff] %vm15, 0.0
    %33 = vst.msk [vmem:[%s2 + $0x88] sm:$0xff] %vm15, 0.0
    %34 = vst.msk [vmem:[%s2 + $0x90] sm:$0xff] %vm15, 0.0
    %35 = vst.msk [vmem:[%s2 + $0x98] sm:$0xff] %vm15, 0.0
    %36 = vst.msk [vmem:[%s2 + $0xa0] sm:$0xff] %vm15, 0.0
    %37 = vst.msk [vmem:[%s2 + $0xa8] sm:$0xff] %vm15, 0.0
    %38 = vst.msk [vmem:[%s2 + $0xb0] sm:$0xff] %vm15, 0.0
    %39 = vst.msk [vmem:[%s2 + $0xb8] sm:$0xff] %vm15, 0.0
    %40 = vst.msk [vmem:[%s2 + $0xc0] sm:$0xff] %vm15, 0.0
    %41 = vst.msk [vmem:[%s2 + $0xc8] sm:$0xff] %vm15, 0.0
    %42 = vst.msk [vmem:[%s2 + $0xd0] sm:$0xff] %vm15, 0.0
    %43 = vst.msk [vmem:[%s2 + $0xd8] sm:$0xff] %vm15, 0.0
    %44 = vst.msk [vmem:[%s2 + $0xe0] sm:$0xff] %vm15, 0.0
    %45 = vst.msk [vmem:[%s2 + $0xe8] sm:$0xff] %vm15, 0.0
    %46 = vst.msk [vmem:[%s2 + $0xf0] sm:$0xff] %vm15, 0.0
    %47 = vst.msk [vmem:[%s2 + $0xf8] sm:$0xff] %vm15, 0.0
    %48 = vst.msk [vmem:[%s2 + $0x100] sm:$0xff] %vm15, 0.0
    %49 = vst.msk [vmem:[%s2 + $0x108] sm:$0xff] %vm15, 0.0
    %50 = vst.msk [vmem:[%s2 + $0x110] sm:$0xff] %vm15, 0.0
    %51 = vst.msk [vmem:[%s2 + $0x118] sm:$0xff] %vm15, 0.0
    %52 = vst.msk [vmem:[%s2 + $0x120] sm:$0xff] %vm15, 0.0
    %53 = vst.msk [vmem:[%s2 + $0x128] sm:$0xff] %vm15, 0.0
  $region13: #{tpu_custom_call.1} parent=0 // pred_fallthru
    _
  %v54 = vld [vmem:[%s0] sm:$0xff]
  %v55 = vld [vmem:[%s0 + $0x8] sm:$0xff]
  %v56 = vld [vmem:[%s0 + $0x10] sm:$0xff]
  %v57 = vld [vmem:[%s0 + $0x18] sm:$0xff]
  %v58 = vld [vmem:[%s0 + $0x20] sm:$0xff]
  %v59 = vld [vmem:[%s0 + $0x28] sm:$0xff]
  %v60 = vld [vmem:[%s0 + $0x30] sm:$0xff]
  %v61 = vld [vmem:[%s0 + $0x38] sm:$0xff]
  %v62 = vld [vmem:[%s0 + $0x40] sm:$0xff]
  %v63 = vld [vmem:[%s0 + $0x48] sm:$0xff]
  %v64 = vld [vmem:[%s0 + $0x50] sm:$0xff]
  %v65 = vld [vmem:[%s0 + $0x58] sm:$0xff]
  %v66 = vld [vmem:[%s0 + $0x60] sm:$0xff]
  %v67 = vld [vmem:[%s0 + $0x68] sm:$0xff]
  %v68 = vld [vmem:[%s0 + $0x70] sm:$0xff]
  %v69 = vld [vmem:[%s0 + $0x78] sm:$0xff]
  %v70 = vld [vmem:[%s0 + $0x80] sm:$0xff]
  %v71 = vld [vmem:[%s0 + $0x88] sm:$0xff]
  %v72 = vld [vmem:[%s0 + $0x90] sm:$0xff]
  %v73 = vld [vmem:[%s0 + $0x98] sm:$0xff]
  %v74 = vld [vmem:[%s0 + $0xa0] sm:$0xff]
  %v75 = vld [vmem:[%s0 + $0xa8] sm:$0xff]
  %v76 = vld [vmem:[%s0 + $0xb0] sm:$0xff]
  %v77 = vld [vmem:[%s0 + $0xb8] sm:$0xff]
  %v78 = vld [vmem:[%s0 + $0xc0] sm:$0xff]
  %v79 = vld [vmem:[%s0 + $0xc8] sm:$0xff]
  %v80 = vld [vmem:[%s0 + $0xd0] sm:$0xff]
  %v81 = vld [vmem:[%s0 + $0xd8] sm:$0xff]
  %v82 = vld [vmem:[%s0 + $0xe0] sm:$0xff]
  %v83 = vld [vmem:[%s0 + $0xe8] sm:$0xff]
  %v84 = vld [vmem:[%s0 + $0xf0] sm:$0xff]
  %v85 = vld [vmem:[%s0 + $0xf8] sm:$0xff]
  %v86 = vld [vmem:[%s0 + $0x100] sm:$0xff]
  %v87 = vld [vmem:[%s0 + $0x108] sm:$0xff]
  %v88 = vld [vmem:[%s0 + $0x110] sm:$0xff]
  %v89 = vld [vmem:[%s0 + $0x118] sm:$0xff]
  %v90 = vld [vmem:[%s0 + $0x120] sm:$0xff]
  %v91 = vld [vmem:[%s0 + $0x128] sm:$0xff]
  %v92 = vld [vmem:[%s0 + $0x130] sm:$0xff]
  %v93 = vld [vmem:[%s0 + $0x138] sm:$0xff]
  %v94 = vld [vmem:[%s0 + $0x140] sm:$0xff]
  %v95 = vld [vmem:[%s0 + $0x148] sm:$0xff]
  %v96 = vld [vmem:[%s0 + $0x150] sm:$0xff]
  %v97 = vld [vmem:[%s0 + $0x158] sm:$0xff]
  %v98 = vld [vmem:[%s0 + $0x160] sm:$0xff]
  %v99 = vld [vmem:[%s0 + $0x168] sm:$0xff]
  %v100 = vld [vmem:[%s0 + $0x170] sm:$0xff]
  %v101 = vld [vmem:[%s0 + $0x178] sm:$0xff]
  %v102 = vld [vmem:[%s0 + $0x180] sm:$0xff]
  %v103 = vld [vmem:[%s0 + $0x188] sm:$0xff]
  %v104 = vld [vmem:[%s0 + $0x190] sm:$0xff]
  %v105 = vld [vmem:[%s0 + $0x198] sm:$0xff]
  %v106 = vld [vmem:[%s0 + $0x1a0] sm:$0xff]
  %v107 = vld [vmem:[%s0 + $0x1a8] sm:$0xff]
  %v108 = vld [vmem:[%s0 + $0x1b0] sm:$0xff]
  %v109 = vld [vmem:[%s0 + $0x1b8] sm:$0xff]
  %v110 = vld [vmem:[%s0 + $0x1c0] sm:$0xff]
  %v111 = vld [vmem:[%s0 + $0x1c8] sm:$0xff]
  %v112 = vld [vmem:[%s0 + $0x1d0] sm:$0xff]
  %v113 = vld [vmem:[%s0 + $0x1d8] sm:$0xff]
  %v114 = vld [vmem:[%s0 + $0x1e0] sm:$0xff]
  %v115 = vld [vmem:[%s0 + $0x1e8] sm:$0xff]
  %v116 = vld [vmem:[%s0 + $0x1f0] sm:$0xff]
  %v117 = vld [vmem:[%s0 + $0x1f8] sm:$0xff]
  %v118 = vld [vmem:[%s0 + $0x200] sm:$0xff]
  %v119 = vld [vmem:[%s0 + $0x208] sm:$0xff]
  %v120 = vld [vmem:[%s0 + $0x210] sm:$0xff]
  %v121 = vld [vmem:[%s0 + $0x218] sm:$0xff]
  %v122 = vld [vmem:[%s0 + $0x220] sm:$0xff]
  %v123 = vld [vmem:[%s0 + $0x228] sm:$0xff]
  %v124 = vld [vmem:[%s0 + $0x230] sm:$0xff]
  %v125 = vld [vmem:[%s0 + $0x238] sm:$0xff]
  %v126 = vld [vmem:[%s0 + $0x240] sm:$0xff]
  %v127 = vld [vmem:[%s0 + $0x248] sm:$0xff]
  %v128 = vld [vmem:[%s0 + $0x250] sm:$0xff]
  %v129 = vld [vmem:[%s0 + $0x258] sm:$0xff]
  %v130 = vld [vmem:[%s1] sm:$0x3]
  %v132 = vlaneseq
  %v133 = vshrl.u32 %v132, 7
  %v134 = vsub.s32 0, %v133
  %v135 = vrot.slane %v130, %v134
  %v136 = vlaneseq
  %v137 = vshrl.u32 %v136, 7
  %v138 = vsub.s32 1, %v137
  %v139 = vrot.slane %v130, %v138
  %v142 = vmul.f32 %v54, %v135
  %v143 = vmul.f32 %v55, %v139
  %v144 = vmul.f32 %v56, %v135
  %v145 = vmul.f32 %v57, %v139
  %v146 = vmul.f32 %v58, %v135
  %v147 = vmul.f32 %v59, %v139
  %v148 = vmul.f32 %v60, %v135
  %v149 = vmul.f32 %v61, %v139
  %v150 = vmul.f32 %v62, %v135
  %v151 = vmul.f32 %v63, %v139
  %v152 = vmul.f32 %v64, %v135
  %v153 = vmul.f32 %v65, %v139
  %v154 = vmul.f32 %v66, %v135
  %v155 = vmul.f32 %v67, %v139
  %v156 = vmul.f32 %v68, %v135
  %v157 = vmul.f32 %v69, %v139
  %v158 = vmul.f32 %v70, %v135
  %v159 = vmul.f32 %v71, %v139
  %v160 = vmul.f32 %v72, %v135
  %v161 = vmul.f32 %v73, %v139
  %v162 = vmul.f32 %v74, %v135
  %v163 = vmul.f32 %v75, %v139
  %v164 = vmul.f32 %v76, %v135
  %v165 = vmul.f32 %v77, %v139
  %v166 = vmul.f32 %v78, %v135
  %v167 = vmul.f32 %v79, %v139
  %v168 = vmul.f32 %v80, %v135
  %v169 = vmul.f32 %v81, %v139
  %v170 = vmul.f32 %v82, %v135
  %v171 = vmul.f32 %v83, %v139
  %v172 = vmul.f32 %v84, %v135
  %v173 = vmul.f32 %v85, %v139
  %v174 = vmul.f32 %v86, %v135
  %v175 = vmul.f32 %v87, %v139
  %v176 = vmul.f32 %v88, %v135
  %v177 = vmul.f32 %v89, %v139
  %v178 = vmul.f32 %v90, %v135
  %v179 = vmul.f32 %v91, %v139
  %v180 = vmul.f32 %v92, %v135
  %v181 = vmul.f32 %v93, %v139
  %v182 = vmul.f32 %v94, %v135
  %v183 = vmul.f32 %v95, %v139
  %v184 = vmul.f32 %v96, %v135
  %v185 = vmul.f32 %v97, %v139
  %v186 = vmul.f32 %v98, %v135
  %v187 = vmul.f32 %v99, %v139
  %v188 = vmul.f32 %v100, %v135
  %v189 = vmul.f32 %v101, %v139
  %v190 = vmul.f32 %v102, %v135
  %v191 = vmul.f32 %v103, %v139
  %v192 = vmul.f32 %v104, %v135
  %v193 = vmul.f32 %v105, %v139
  %v194 = vmul.f32 %v106, %v135
  %v195 = vmul.f32 %v107, %v139
  %v196 = vmul.f32 %v108, %v135
  %v197 = vmul.f32 %v109, %v139
  %v198 = vmul.f32 %v110, %v135
  %v199 = vmul.f32 %v111, %v139
  %v200 = vmul.f32 %v112, %v135
  %v201 = vmul.f32 %v113, %v139
  %v202 = vmul.f32 %v114, %v135
  %v203 = vmul.f32 %v115, %v139
  %v204 = vmul.f32 %v116, %v135
  %v205 = vmul.f32 %v117, %v139
  %v206 = vmul.f32 %v118, %v135
  %v207 = vmul.f32 %v119, %v139
  %v208 = vmul.f32 %v120, %v135
  %v209 = vmul.f32 %v121, %v139
  %v210 = vmul.f32 %v122, %v135
  %v211 = vmul.f32 %v123, %v139
  %v212 = vmul.f32 %v124, %v135
  %v213 = vmul.f32 %v125, %v139
  %v214 = vmul.f32 %v126, %v135
  %v215 = vmul.f32 %v127, %v139
  %v216 = vmul.f32 %v128, %v135
  %v217 = vmul.f32 %v129, %v139
  %v218 = vld [vmem:[%s2] sm:$0xff]
  %v219 = vld [vmem:[%s2 + $0x8] sm:$0xff]
  %v220 = vld [vmem:[%s2 + $0x10] sm:$0xff]
  %v221 = vld [vmem:[%s2 + $0x18] sm:$0xff]
  %v222 = vld [vmem:[%s2 + $0x20] sm:$0xff]
  %v223 = vld [vmem:[%s2 + $0x28] sm:$0xff]
  %v224 = vld [vmem:[%s2 + $0x30] sm:$0xff]
  %v225 = vld [vmem:[%s2 + $0x38] sm:$0xff]
  %v226 = vld [vmem:[%s2 + $0x40] sm:$0xff]
  %v227 = vld [vmem:[%s2 + $0x48] sm:$0xff]
  %v228 = vld [vmem:[%s2 + $0x50] sm:$0xff]
  %v229 = vld [vmem:[%s2 + $0x58] sm:$0xff]
  %v230 = vld [vmem:[%s2 + $0x60] sm:$0xff]
  %v231 = vld [vmem:[%s2 + $0x68] sm:$0xff]
  %v232 = vld [vmem:[%s2 + $0x70] sm:$0xff]
  %v233 = vld [vmem:[%s2 + $0x78] sm:$0xff]
  %v234 = vld [vmem:[%s2 + $0x80] sm:$0xff]
  %v235 = vld [vmem:[%s2 + $0x88] sm:$0xff]
  %v236 = vld [vmem:[%s2 + $0x90] sm:$0xff]
  %v237 = vld [vmem:[%s2 + $0x98] sm:$0xff]
  %v238 = vld [vmem:[%s2 + $0xa0] sm:$0xff]
  %v239 = vld [vmem:[%s2 + $0xa8] sm:$0xff]
  %v240 = vld [vmem:[%s2 + $0xb0] sm:$0xff]
  %v241 = vld [vmem:[%s2 + $0xb8] sm:$0xff]
  %v242 = vld [vmem:[%s2 + $0xc0] sm:$0xff]
  %v243 = vld [vmem:[%s2 + $0xc8] sm:$0xff]
  %v244 = vld [vmem:[%s2 + $0xd0] sm:$0xff]
  %v245 = vld [vmem:[%s2 + $0xd8] sm:$0xff]
  %v246 = vld [vmem:[%s2 + $0xe0] sm:$0xff]
  %v247 = vld [vmem:[%s2 + $0xe8] sm:$0xff]
  %v248 = vld [vmem:[%s2 + $0xf0] sm:$0xff]
  %v249 = vld [vmem:[%s2 + $0xf8] sm:$0xff]
  %v250 = vld [vmem:[%s2 + $0x100] sm:$0xff]
  %v251 = vld [vmem:[%s2 + $0x108] sm:$0xff]
  %v252 = vld [vmem:[%s2 + $0x110] sm:$0xff]
  %v253 = vld [vmem:[%s2 + $0x118] sm:$0xff]
  %v254 = vld [vmem:[%s2 + $0x120] sm:$0xff]
  %v255 = vld [vmem:[%s2 + $0x128] sm:$0xff]
  %vm256 = vcmask 588800
  %v257 = vsel %vm256, %v143, 0.0
  %v258 = vadd.f32 %v142, %v257
  %259 = vadd.xlane.f32.xlu0 %v258
  %v260 = vpop.xlane.xlu0 %259
  %v261 = vsel %vm256, %v145, 0.0
  %v262 = vadd.f32 %v144, %v261
  %263 = vadd.xlane.f32.xlu0 %v262
  %v264 = vpop.xlane.xlu0 %263
  %v265 = vsel %vm256, %v147, 0.0
  %v266 = vadd.f32 %v146, %v265
  %267 = vadd.xlane.f32.xlu0 %v266
  %v268 = vpop.xlane.xlu0 %267
  %v269 = vsel %vm256, %v149, 0.0
  %v270 = vadd.f32 %v148, %v269
  %271 = vadd.xlane.f32.xlu0 %v270
  %v272 = vpop.xlane.xlu0 %271
  %v273 = vsel %vm256, %v151, 0.0
  %v274 = vadd.f32 %v150, %v273
  %275 = vadd.xlane.f32.xlu0 %v274
  %v276 = vpop.xlane.xlu0 %275
  %v277 = vsel %vm256, %v153, 0.0
  %v278 = vadd.f32 %v152, %v277
  %279 = vadd.xlane.f32.xlu0 %v278
  %v280 = vpop.xlane.xlu0 %279
  %v281 = vsel %vm256, %v155, 0.0
  %v282 = vadd.f32 %v154, %v281
  %283 = vadd.xlane.f32.xlu0 %v282
  %v284 = vpop.xlane.xlu0 %283
  %v285 = vsel %vm256, %v157, 0.0
  %v286 = vadd.f32 %v156, %v285
  %287 = vadd.xlane.f32.xlu0 %v286
  %v288 = vpop.xlane.xlu0 %287
  %v289 = vsel %vm256, %v159, 0.0
  %v290 = vadd.f32 %v158, %v289
  %291 = vadd.xlane.f32.xlu0 %v290
  %v292 = vpop.xlane.xlu0 %291
  %v293 = vsel %vm256, %v161, 0.0
  %v294 = vadd.f32 %v160, %v293
  %295 = vadd.xlane.f32.xlu0 %v294
  %v296 = vpop.xlane.xlu0 %295
  %v297 = vsel %vm256, %v163, 0.0
  %v298 = vadd.f32 %v162, %v297
  %299 = vadd.xlane.f32.xlu0 %v298
  %v300 = vpop.xlane.xlu0 %299
  %v301 = vsel %vm256, %v165, 0.0
  %v302 = vadd.f32 %v164, %v301
  %303 = vadd.xlane.f32.xlu0 %v302
  %v304 = vpop.xlane.xlu0 %303
  %v305 = vsel %vm256, %v167, 0.0
  %v306 = vadd.f32 %v166, %v305
  %307 = vadd.xlane.f32.xlu0 %v306
  %v308 = vpop.xlane.xlu0 %307
  %v309 = vsel %vm256, %v169, 0.0
  %v310 = vadd.f32 %v168, %v309
  %311 = vadd.xlane.f32.xlu0 %v310
  %v312 = vpop.xlane.xlu0 %311
  %v313 = vsel %vm256, %v171, 0.0
  %v314 = vadd.f32 %v170, %v313
  %315 = vadd.xlane.f32.xlu0 %v314
  %v316 = vpop.xlane.xlu0 %315
  %v317 = vsel %vm256, %v173, 0.0
  %v318 = vadd.f32 %v172, %v317
  %319 = vadd.xlane.f32.xlu0 %v318
  %v320 = vpop.xlane.xlu0 %319
  %v321 = vsel %vm256, %v175, 0.0
  %v322 = vadd.f32 %v174, %v321
  %323 = vadd.xlane.f32.xlu0 %v322
  %v324 = vpop.xlane.xlu0 %323
  %v325 = vsel %vm256, %v177, 0.0
  %v326 = vadd.f32 %v176, %v325
  %327 = vadd.xlane.f32.xlu0 %v326
  %v328 = vpop.xlane.xlu0 %327
  %v329 = vsel %vm256, %v179, 0.0
  %v330 = vadd.f32 %v178, %v329
  %331 = vadd.xlane.f32.xlu0 %v330
  %v332 = vpop.xlane.xlu0 %331
  %v333 = vsel %vm256, %v181, 0.0
  %v334 = vadd.f32 %v180, %v333
  %335 = vadd.xlane.f32.xlu0 %v334
  %v336 = vpop.xlane.xlu0 %335
  %v337 = vsel %vm256, %v183, 0.0
  %v338 = vadd.f32 %v182, %v337
  %339 = vadd.xlane.f32.xlu0 %v338
  %v340 = vpop.xlane.xlu0 %339
  %v341 = vsel %vm256, %v185, 0.0
  %v342 = vadd.f32 %v184, %v341
  %343 = vadd.xlane.f32.xlu0 %v342
  %v344 = vpop.xlane.xlu0 %343
  %v345 = vsel %vm256, %v187, 0.0
  %v346 = vadd.f32 %v186, %v345
  %347 = vadd.xlane.f32.xlu0 %v346
  %v348 = vpop.xlane.xlu0 %347
  %v349 = vsel %vm256, %v189, 0.0
  %v350 = vadd.f32 %v188, %v349
  %351 = vadd.xlane.f32.xlu0 %v350
  %v352 = vpop.xlane.xlu0 %351
  %v353 = vsel %vm256, %v191, 0.0
  %v354 = vadd.f32 %v190, %v353
  %355 = vadd.xlane.f32.xlu0 %v354
  %v356 = vpop.xlane.xlu0 %355
  %v357 = vsel %vm256, %v193, 0.0
  %v358 = vadd.f32 %v192, %v357
  %359 = vadd.xlane.f32.xlu0 %v358
  %v360 = vpop.xlane.xlu0 %359
  %v361 = vsel %vm256, %v195, 0.0
  %v362 = vadd.f32 %v194, %v361
  %363 = vadd.xlane.f32.xlu0 %v362
  %v364 = vpop.xlane.xlu0 %363
  %v365 = vsel %vm256, %v197, 0.0
  %v366 = vadd.f32 %v196, %v365
  %367 = vadd.xlane.f32.xlu0 %v366
  %v368 = vpop.xlane.xlu0 %367
  %v369 = vsel %vm256, %v199, 0.0
  %v370 = vadd.f32 %v198, %v369
  %371 = vadd.xlane.f32.xlu0 %v370
  %v372 = vpop.xlane.xlu0 %371
  %v373 = vsel %vm256, %v201, 0.0
  %v374 = vadd.f32 %v200, %v373
  %375 = vadd.xlane.f32.xlu0 %v374
  %v376 = vpop.xlane.xlu0 %375
  %v377 = vsel %vm256, %v203, 0.0
  %v378 = vadd.f32 %v202, %v377
  %379 = vadd.xlane.f32.xlu0 %v378
  %v380 = vpop.xlane.xlu0 %379
  %v381 = vsel %vm256, %v205, 0.0
  %v382 = vadd.f32 %v204, %v381
  %383 = vadd.xlane.f32.xlu0 %v382
  %v384 = vpop.xlane.xlu0 %383
  %v385 = vsel %vm256, %v207, 0.0
  %v386 = vadd.f32 %v206, %v385
  %387 = vadd.xlane.f32.xlu0 %v386
  %v388 = vpop.xlane.xlu0 %387
  %v389 = vsel %vm256, %v209, 0.0
  %v390 = vadd.f32 %v208, %v389
  %391 = vadd.xlane.f32.xlu0 %v390
  %v392 = vpop.xlane.xlu0 %391
  %v393 = vsel %vm256, %v211, 0.0
  %v394 = vadd.f32 %v210, %v393
  %395 = vadd.xlane.f32.xlu0 %v394
  %v396 = vpop.xlane.xlu0 %395
  %v397 = vsel %vm256, %v213, 0.0
  %v398 = vadd.f32 %v212, %v397
  %399 = vadd.xlane.f32.xlu0 %v398
  %v400 = vpop.xlane.xlu0 %399
  %v401 = vsel %vm256, %v215, 0.0
  %v402 = vadd.f32 %v214, %v401
  %403 = vadd.xlane.f32.xlu0 %v402
  %v404 = vpop.xlane.xlu0 %403
  %v405 = vsel %vm256, %v217, 0.0
  %v406 = vadd.f32 %v216, %v405
  %407 = vadd.xlane.f32.xlu0 %v406
  %v408 = vpop.xlane.xlu0 %407
  %v409 = vadd.f32 %v218, %v260
  %v410 = vadd.f32 %v219, %v264
  %v411 = vadd.f32 %v220, %v268
  %v412 = vadd.f32 %v221, %v272
  %v413 = vadd.f32 %v222, %v276
  %v414 = vadd.f32 %v223, %v280
  %v415 = vadd.f32 %v224, %v284
  %v416 = vadd.f32 %v225, %v288
  %v417 = vadd.f32 %v226, %v292
  %v418 = vadd.f32 %v227, %v296
  %v419 = vadd.f32 %v228, %v300
  %v420 = vadd.f32 %v229, %v304
  %v421 = vadd.f32 %v230, %v308
  %v422 = vadd.f32 %v231, %v312
  %v423 = vadd.f32 %v232, %v316
  %v424 = vadd.f32 %v233, %v320
  %v425 = vadd.f32 %v234, %v324
  %v426 = vadd.f32 %v235, %v328
  %v427 = vadd.f32 %v236, %v332
  %v428 = vadd.f32 %v237, %v336
  %v429 = vadd.f32 %v238, %v340
  %v430 = vadd.f32 %v239, %v344
  %v431 = vadd.f32 %v240, %v348
  %v432 = vadd.f32 %v241, %v352
  %v433 = vadd.f32 %v242, %v356
  %v434 = vadd.f32 %v243, %v360
  %v435 = vadd.f32 %v244, %v364
  %v436 = vadd.f32 %v245, %v368
  %v437 = vadd.f32 %v246, %v372
  %v438 = vadd.f32 %v247, %v376
  %v439 = vadd.f32 %v248, %v380
  %v440 = vadd.f32 %v249, %v384
  %v441 = vadd.f32 %v250, %v388
  %v442 = vadd.f32 %v251, %v392
  %v443 = vadd.f32 %v252, %v396
  %v444 = vadd.f32 %v253, %v400
  %v445 = vadd.f32 %v254, %v404
  %v446 = vadd.f32 %v255, %v408
  %vm447 = vcmask 7168
  %448 = vst.msk [vmem:[%s2] sm:$0xff] %vm447, %v409
  %449 = vst.msk [vmem:[%s2 + $0x8] sm:$0xff] %vm447, %v410
  %450 = vst.msk [vmem:[%s2 + $0x10] sm:$0xff] %vm447, %v411
  %451 = vst.msk [vmem:[%s2 + $0x18] sm:$0xff] %vm447, %v412
  %452 = vst.msk [vmem:[%s2 + $0x20] sm:$0xff] %vm447, %v413
  %453 = vst.msk [vmem:[%s2 + $0x28] sm:$0xff] %vm447, %v414
  %454 = vst.msk [vmem:[%s2 + $0x30] sm:$0xff] %vm447, %v415
  %455 = vst.msk [vmem:[%s2 + $0x38] sm:$0xff] %vm447, %v416
  %456 = vst.msk [vmem:[%s2 + $0x40] sm:$0xff] %vm447, %v417
  %457 = vst.msk [vmem:[%s2 + $0x48] sm:$0xff] %vm447, %v418
  %458 = vst.msk [vmem:[%s2 + $0x50] sm:$0xff] %vm447, %v419
  %459 = vst.msk [vmem:[%s2 + $0x58] sm:$0xff] %vm447, %v420
  %460 = vst.msk [vmem:[%s2 + $0x60] sm:$0xff] %vm447, %v421
  %461 = vst.msk [vmem:[%s2 + $0x68] sm:$0xff] %vm447, %v422
  %462 = vst.msk [vmem:[%s2 + $0x70] sm:$0xff] %vm447, %v423
  %463 = vst.msk [vmem:[%s2 + $0x78] sm:$0xff] %vm447, %v424
  %464 = vst.msk [vmem:[%s2 + $0x80] sm:$0xff] %vm447, %v425
  %465 = vst.msk [vmem:[%s2 + $0x88] sm:$0xff] %vm447, %v426
  %466 = vst.msk [vmem:[%s2 + $0x90] sm:$0xff] %vm447, %v427
  %467 = vst.msk [vmem:[%s2 + $0x98] sm:$0xff] %vm447, %v428
  %468 = vst.msk [vmem:[%s2 + $0xa0] sm:$0xff] %vm447, %v429
  %469 = vst.msk [vmem:[%s2 + $0xa8] sm:$0xff] %vm447, %v430
  %470 = vst.msk [vmem:[%s2 + $0xb0] sm:$0xff] %vm447, %v431
  %471 = vst.msk [vmem:[%s2 + $0xb8] sm:$0xff] %vm447, %v432
  %472 = vst.msk [vmem:[%s2 + $0xc0] sm:$0xff] %vm447, %v433
  %473 = vst.msk [vmem:[%s2 + $0xc8] sm:$0xff] %vm447, %v434
  %474 = vst.msk [vmem:[%s2 + $0xd0] sm:$0xff] %vm447, %v435
  %475 = vst.msk [vmem:[%s2 + $0xd8] sm:$0xff] %vm447, %v436
  %476 = vst.msk [vmem:[%s2 + $0xe0] sm:$0xff] %vm447, %v437
  %477 = vst.msk [vmem:[%s2 + $0xe8] sm:$0xff] %vm447, %v438
  %478 = vst.msk [vmem:[%s2 + $0xf0] sm:$0xff] %vm447, %v439
  %479 = vst.msk [vmem:[%s2 + $0xf8] sm:$0xff] %vm447, %v440
  %480 = vst.msk [vmem:[%s2 + $0x100] sm:$0xff] %vm447, %v441
  %481 = vst.msk [vmem:[%s2 + $0x108] sm:$0xff] %vm447, %v442
  %482 = vst.msk [vmem:[%s2 + $0x110] sm:$0xff] %vm447, %v443
  %483 = vst.msk [vmem:[%s2 + $0x118] sm:$0xff] %vm447, %v444
  %484 = vst.msk [vmem:[%s2 + $0x120] sm:$0xff] %vm447, %v445
  %485 = vst.msk [vmem:[%s2 + $0x128] sm:$0xff] %vm447, %v446
  // Predicated region
  $region14: #{tpu_custom_call.1} parent=0 // pred_check
    _
  $region15: #{tpu_custom_call.1} parent=0 // pred_check_branch
    %487 = sbr.rel (0) target = $region17
  $region16: #{tpu_custom_call.1} parent=0 // pred_region
    _
  $region17: #{tpu_custom_call.1} parent=0 // pred_fallthru
    _
  // Predicated region
  $region18: #{tpu_custom_call.1} parent=0 // pred_check
    _
  $region19: #{tpu_custom_call.1} parent=0 // pred_check_branch
    %489 = sbr.rel (0) target = $region21
  $region20: #{tpu_custom_call.1} parent=0 // pred_region
    _
  $region21: #{tpu_custom_call.1} parent=0 // pred_fallthru
    _

</llo_original>
